<compile_context>
chip_gen: v6e
topology: v6e:2x2x1
jax: 0.10.0
libtpu: 0.0.40
codegen_flags: <defaults>
</compile_context>

<pallas_src>
import functools

import jax
import jax.numpy as jnp
from jax import lax
from jax.experimental import pallas as pl
from jax.experimental.pallas import tpu as pltpu

_LANES = 128      # TPU lane width
_CHUNK = 1024     # lanes processed per inner-loop iteration (bounds live ranges)
_MAX_TB = 65536   # cap on the batch tile (keeps tiles inside scoped-VMEM defaults)


def _sigmoid(h):
    # Exact identity sigmoid(x) = 0.5 * (1 + tanh(x / 2)); single EUP op.
    return 0.5 * jnp.tanh(0.5 * h) + 0.5


def _round_up(x, m):
    return ((x + m - 1) // m) * m


def _phi_nn_kernel(x_ref,
                   w0_ref, b0_ref,
                   w1_ref, b1_ref,
                   w2_ref, b2_ref,
                   w3t_ref, b3_ref,
                   o_ref,
                   *, chunk, nc_full, rem):
    """Fused MLP forward on one (n_dim, TB) batch tile.

    Activations are (features, lanes); weights are (out, in) so each hidden
    layer is sigmoid(W @ h + b) on the MXU with f32 accumulation.  The 1-row
    head is a VPU multiply by the (F, 1) w3 column + XLU sublane reduce.
    The tile is processed in `chunk`-lane sub-chunks so f32 intermediates stay
    small regardless of tile size.
    """
    mm = w0_ref.dtype                    # matmul operand dtype (f32 or bf16)
    w0 = w0_ref[...]
    w1 = w1_ref[...]
    w2 = w2_ref[...]
    b0 = b0_ref[...]
    b1 = b1_ref[...]
    b2 = b2_ref[...]
    w3t = w3t_ref[...]                   # (F, 1) f32, head column
    b3 = b3_ref[...]                     # (1, 1) f32

    def process(start, size):
        xc = x_ref[:, pl.ds(start, size)].astype(mm)                 # (n_dim, size)
        h = jnp.dot(w0, xc, preferred_element_type=jnp.float32) + b0
        h = _sigmoid(h)
        h = jnp.dot(w1, h.astype(mm), preferred_element_type=jnp.float32) + b1
        h = _sigmoid(h)
        h = jnp.dot(w2, h.astype(mm), preferred_element_type=jnp.float32) + b2
        h = _sigmoid(h)
        # Output head off the MXU: VPU mul + cross-sublane (XLU) reduce.
        out = jnp.sum(h * w3t, axis=0, keepdims=True) + b3           # (1, size)
        o_ref[:, pl.ds(start, size)] = out.astype(o_ref.dtype)

    if nc_full > 0:
        def body(c, carry):
            process(pl.multiple_of(c * chunk, _LANES), chunk)
            return carry
        lax.fori_loop(0, nc_full, body, None, unroll=(nc_full <= 8))
    if rem > 0:
        process(nc_full * chunk, rem)


def _choose_tiling(B, tb):
    """Pick (TB, B_pad): a 128-aligned batch tile and padded batch length.

    Keeps padding waste small (~n_steps * 128 lanes) and forces >=2 grid steps
    for non-tiny batches so megacore parts (v7x) can split the grid.
    """
    tb = min(_MAX_TB, max(_LANES, _round_up(int(tb), _LANES)))
    n_steps = -(-B // tb)
    if n_steps == 1 and B >= 2 * _LANES:
        n_steps = 2
    TB = min(tb, _round_up(-(-B // n_steps), _LANES))
    B_pad = _round_up(B, TB)
    return TB, B_pad


@functools.partial(jax.jit, static_argnames=("tb", "use_bf16"))
def phi_nn_forward_t(x_t, params, tb=32768, use_bf16=False):
    """Transposed-layout entry point.

    x_t: (n_dim, B) float32 -- batch already on the fast (lane) axis; this
    avoids the extra transpose copy of the PyTorch-convention wrapper.
    Returns (1, B).
    """
    n_dim, B = x_t.shape
    F = params["w0"].shape[0]

    TB, B_pad = _choose_tiling(B, tb)
    grid = (B_pad // TB,)
    chunk = min(_CHUNK, TB)
    nc_full, rem = divmod(TB, chunk)

    if B_pad > B:
        x_t = jnp.pad(x_t, ((0, 0), (0, B_pad - B)))

    mm_dtype = jnp.bfloat16 if use_bf16 else x_t.dtype
    w0 = params["w0"].astype(mm_dtype)
    w1 = params["w1"].astype(mm_dtype)
    w2 = params["w2"].astype(mm_dtype)
    b0, b1, b2 = params["b0"], params["b1"], params["b2"]
    w3t = params["w3"].reshape(F, 1)         # (1, F) -> (F, 1) head column (f32)
    b3 = params["b3"].reshape(1, 1)

    resident = lambda shape: pl.BlockSpec(shape, lambda i: (0, 0))

    kernel = functools.partial(_phi_nn_kernel,
                               chunk=chunk, nc_full=nc_full, rem=rem)

    out_p = pl.pallas_call(
        kernel,
        out_shape=jax.ShapeDtypeStruct((1, B_pad), x_t.dtype),
        grid=grid,
        in_specs=[
            pl.BlockSpec((n_dim, TB), lambda i: (0, i)),   # x tile (streamed)
            resident((F, n_dim)), resident((F, 1)),        # w0, b0 (VMEM-resident)
            resident((F, F)),     resident((F, 1)),        # w1, b1
            resident((F, F)),     resident((F, 1)),        # w2, b2
            resident((F, 1)),     resident((1, 1)),        # w3 column, b3
        ],
        out_specs=pl.BlockSpec((1, TB), lambda i: (0, i)), # lane-dense output tile
        compiler_params=pltpu.CompilerParams(
            dimension_semantics=("parallel",),
        ),
    )(x_t, w0, b0, w1, b1, w2, b2, w3t, b3)

    return out_p[:, :B]


@functools.partial(jax.jit, static_argnames=("tb", "use_bf16"))
def phi_nn_forward(x, params, tb=32768, use_bf16=False):
    """PyTorch-convention wrapper: x (B, n_dim) float32 -> (B, 1)."""
    return phi_nn_forward_t(x.T, params, tb=tb, use_bf16=use_bf16).T


def init_params(key, n_dim=3, n_hidden=3, n_features=32, dtype=jnp.float32):
    """Deterministic synthetic parameters matching PhiNN layer shapes.

    Weights in the native PyTorch layout (out_features, in_features); biases
    as (out_features, 1) for TPU-friendly 2D layout.
    """
    assert n_hidden == 3, "kernel is specialized to n_hidden=3 (the default)"
    keys = jax.random.split(key, 8)
    params = {}
    dims = [(n_dim, n_features),
            (n_features, n_features),
            (n_features, n_features),
            (n_features, 1)]
    for i, (fan_in, fan_out) in enumerate(dims):
        # Same uniform(-1/sqrt(fan_in), 1/sqrt(fan_in)) init as torch.nn.Linear.
        bound = 1.0 / jnp.sqrt(jnp.asarray(fan_in, dtype))
        params[f"w{i}"] = jax.random.uniform(
            keys[2 * i], (fan_out, fan_in), dtype, minval=-bound, maxval=bound)
        params[f"b{i}"] = jax.random.uniform(
            keys[2 * i + 1], (fan_out, 1), dtype, minval=-bound, maxval=bound)
    return params


def phi_nn_reference(x, params):
    """Pure-JAX reference for correctness checking (PyTorch weight layout)."""
    h = jax.nn.sigmoid(x @ params["w0"].T + params["b0"].T)
    h = jax.nn.sigmoid(h @ params["w1"].T + params["b1"].T)
    h = jax.nn.sigmoid(h @ params["w2"].T + params["b2"].T)
    return h @ params["w3"].T + params["b3"].T


if __name__ == "__main__":
    key = jax.random.PRNGKey(0)
    k_x, k_p, k_x2 = jax.random.split(key, 3)

    n_dim = 3
    params = init_params(k_p, n_dim=n_dim, n_hidden=3, n_features=32)

    # Small batch: single grid step, remainder-chunk path.
    x_small = jax.random.normal(k_x, (8, n_dim), jnp.float32)
    out_small = jax.block_until_ready(phi_nn_forward(x_small, params))
    ref_small = phi_nn_reference(x_small, params)
    assert out_small.shape == (8, 1), out_small.shape
    assert jnp.allclose(out_small, ref_small, atol=2e-5, rtol=1e-5)

    # Larger batch: 2 grid steps (megacore-friendly), inner chunk loop +
    # ragged remainder chunk + batch padding.
    x_big = jax.random.normal(k_x2, (2500, n_dim), jnp.float32)
    out_big = jax.block_until_ready(phi_nn_forward(x_big, params))
    ref_big = phi_nn_reference(x_big, params)
    assert out_big.shape == (2500, 1), out_big.shape
    assert jnp.allclose(out_big, ref_big, atol=2e-5, rtol=1e-5)

    # Optional bf16-matmul path (f32 accumulation + f32 sigmoid): looser tol.
    out_bf16 = jax.block_until_ready(phi_nn_forward(x_big, params, use_bf16=True))
    assert out_bf16.shape == (2500, 1), out_bf16.shape
    assert jnp.allclose(out_bf16, ref_big, atol=2e-2, rtol=2e-2)

    print("KERNEL_OK")
</pallas_src>

<mosaic_0001>
module attributes {stable_mosaic.version = 11 : i64} {
  func.func @_phi_nn_kernel(%arg0: i32, %arg1: memref<3x128xf32, #tpu.memory_space<vmem>>, %arg2: memref<32x3xf32, #tpu.memory_space<vmem>>, %arg3: memref<32x1xf32, #tpu.memory_space<vmem>>, %arg4: memref<32x32xf32, #tpu.memory_space<vmem>>, %arg5: memref<32x1xf32, #tpu.memory_space<vmem>>, %arg6: memref<32x32xf32, #tpu.memory_space<vmem>>, %arg7: memref<32x1xf32, #tpu.memory_space<vmem>>, %arg8: memref<32x1xf32, #tpu.memory_space<vmem>>, %arg9: memref<1x1xf32, #tpu.memory_space<vmem>>, %arg10: memref<1x128xf32, #tpu.memory_space<vmem>>) attributes {dimension_semantics = [#tpu.dimension_semantics<parallel>], iteration_bounds = array<i64: 1>, scalar_prefetch = 0 : i64, scratch_operands = 0 : i64, tpu.core_type = #tpu.core_type<tc>, window_params = [{transform_indices = @transform_0, window_bounds = array<i64: 3, 128>}, {pipeline_mode = #tpu.pipeline_mode<synchronous>, transform_indices = @transform_1, window_bounds = array<i64: 32, 3>}, {pipeline_mode = #tpu.pipeline_mode<synchronous>, transform_indices = @transform_2, window_bounds = array<i64: 32, 1>}, {pipeline_mode = #tpu.pipeline_mode<synchronous>, transform_indices = @transform_3, window_bounds = array<i64: 32, 32>}, {pipeline_mode = #tpu.pipeline_mode<synchronous>, transform_indices = @transform_4, window_bounds = array<i64: 32, 1>}, {pipeline_mode = #tpu.pipeline_mode<synchronous>, transform_indices = @transform_5, window_bounds = array<i64: 32, 32>}, {pipeline_mode = #tpu.pipeline_mode<synchronous>, transform_indices = @transform_6, window_bounds = array<i64: 32, 1>}, {pipeline_mode = #tpu.pipeline_mode<synchronous>, transform_indices = @transform_7, window_bounds = array<i64: 32, 1>}, {pipeline_mode = #tpu.pipeline_mode<synchronous>, transform_indices = @transform_8, window_bounds = array<i64: 1, 1>}, {transform_indices = @transform_9, window_bounds = array<i64: 1, 128>}]} {
    %c0 = arith.constant 0 : index
    %c0_0 = arith.constant 0 : index
    %0 = vector.load %arg2[%c0, %c0_0] : memref<32x3xf32, #tpu.memory_space<vmem>>, vector<32x3xf32>
    %c0_1 = arith.constant 0 : index
    %c0_2 = arith.constant 0 : index
    %1 = vector.load %arg4[%c0_1, %c0_2] : memref<32x32xf32, #tpu.memory_space<vmem>>, vector<32x32xf32>
    %c0_3 = arith.constant 0 : index
    %c0_4 = arith.constant 0 : index
    %2 = vector.load %arg6[%c0_3, %c0_4] : memref<32x32xf32, #tpu.memory_space<vmem>>, vector<32x32xf32>
    %c0_5 = arith.constant 0 : index
    %c0_6 = arith.constant 0 : index
    %3 = vector.load %arg3[%c0_5, %c0_6] : memref<32x1xf32, #tpu.memory_space<vmem>>, vector<32x1xf32>
    %c0_7 = arith.constant 0 : index
    %c0_8 = arith.constant 0 : index
    %4 = vector.load %arg5[%c0_7, %c0_8] : memref<32x1xf32, #tpu.memory_space<vmem>>, vector<32x1xf32>
    %c0_9 = arith.constant 0 : index
    %c0_10 = arith.constant 0 : index
    %5 = vector.load %arg7[%c0_9, %c0_10] : memref<32x1xf32, #tpu.memory_space<vmem>>, vector<32x1xf32>
    %c0_11 = arith.constant 0 : index
    %c0_12 = arith.constant 0 : index
    %6 = vector.load %arg8[%c0_11, %c0_12] : memref<32x1xf32, #tpu.memory_space<vmem>>, vector<32x1xf32>
    %c0_13 = arith.constant 0 : index
    %c0_14 = arith.constant 0 : index
    %7 = vector.load %arg9[%c0_13, %c0_14] : memref<1x1xf32, #tpu.memory_space<vmem>>, vector<1x1xf32>
    %c0_i32 = arith.constant 0 : i32
    %c128_i32 = arith.constant 128 : i32
    %8 = arith.muli %c0_i32, %c128_i32 : i32
    %9 = tpu.assume_multiple %8, 128 : i32
    %c0_15 = arith.constant 0 : index
    %10 = arith.index_cast %9 : i32 to index
    %11 = vector.load %arg1[%c0_15, %10] : memref<3x128xf32, #tpu.memory_space<vmem>>, vector<3x128xf32>
    %cst = arith.constant dense<0.000000e+00> : vector<32x128xf32>
    %12 = tpu.matmul %0, %11, %cst {dimension_numbers = #tpu.dot_dimension_numbers<[1], [0], [0], [1], [0, 0, 1, 1], [], []>} : vector<32x3xf32>, vector<3x128xf32>, vector<32x128xf32> -> vector<32x128xf32>
    %13 = vector.broadcast %3 : vector<32x1xf32> to vector<32x128xf32>
    %14 = arith.addf %12, %13 : vector<32x128xf32>
    %cst_16 = arith.constant 5.000000e-01 : f32
    %15 = vector.broadcast %cst_16 : f32 to vector<32x128xf32>
    %16 = arith.mulf %15, %14 : vector<32x128xf32>
    %17 = math.tanh %16 : vector<32x128xf32>
    %cst_17 = arith.constant 5.000000e-01 : f32
    %18 = vector.broadcast %cst_17 : f32 to vector<32x128xf32>
    %19 = arith.mulf %18, %17 : vector<32x128xf32>
    %cst_18 = arith.constant 5.000000e-01 : f32
    %20 = vector.broadcast %cst_18 : f32 to vector<32x128xf32>
    %21 = arith.addf %19, %20 : vector<32x128xf32>
    %cst_19 = arith.constant dense<0.000000e+00> : vector<32x128xf32>
    %22 = tpu.matmul %1, %21, %cst_19 {dimension_numbers = #tpu.dot_dimension_numbers<[1], [0], [0], [1], [0, 0, 1, 1], [], []>} : vector<32x32xf32>, vector<32x128xf32>, vector<32x128xf32> -> vector<32x128xf32>
    %23 = vector.broadcast %4 : vector<32x1xf32> to vector<32x128xf32>
    %24 = arith.addf %22, %23 : vector<32x128xf32>
    %cst_20 = arith.constant 5.000000e-01 : f32
    %25 = vector.broadcast %cst_20 : f32 to vector<32x128xf32>
    %26 = arith.mulf %25, %24 : vector<32x128xf32>
    %27 = math.tanh %26 : vector<32x128xf32>
    %cst_21 = arith.constant 5.000000e-01 : f32
    %28 = vector.broadcast %cst_21 : f32 to vector<32x128xf32>
    %29 = arith.mulf %28, %27 : vector<32x128xf32>
    %cst_22 = arith.constant 5.000000e-01 : f32
    %30 = vector.broadcast %cst_22 : f32 to vector<32x128xf32>
    %31 = arith.addf %29, %30 : vector<32x128xf32>
    %cst_23 = arith.constant dense<0.000000e+00> : vector<32x128xf32>
    %32 = tpu.matmul %2, %31, %cst_23 {dimension_numbers = #tpu.dot_dimension_numbers<[1], [0], [0], [1], [0, 0, 1, 1], [], []>} : vector<32x32xf32>, vector<32x128xf32>, vector<32x128xf32> -> vector<32x128xf32>
    %33 = vector.broadcast %5 : vector<32x1xf32> to vector<32x128xf32>
    %34 = arith.addf %32, %33 : vector<32x128xf32>
    %cst_24 = arith.constant 5.000000e-01 : f32
    %35 = vector.broadcast %cst_24 : f32 to vector<32x128xf32>
    %36 = arith.mulf %35, %34 : vector<32x128xf32>
    %37 = math.tanh %36 : vector<32x128xf32>
    %cst_25 = arith.constant 5.000000e-01 : f32
    %38 = vector.broadcast %cst_25 : f32 to vector<32x128xf32>
    %39 = arith.mulf %38, %37 : vector<32x128xf32>
    %cst_26 = arith.constant 5.000000e-01 : f32
    %40 = vector.broadcast %cst_26 : f32 to vector<32x128xf32>
    %41 = arith.addf %39, %40 : vector<32x128xf32>
    %42 = vector.broadcast %6 : vector<32x1xf32> to vector<32x128xf32>
    %43 = arith.mulf %41, %42 : vector<32x128xf32>
    %cst_27 = arith.constant dense<0.000000e+00> : vector<128xf32>
    %44 = vector.multi_reduction <add>, %43, %cst_27 [0] : vector<32x128xf32> to vector<128xf32>
    %45 = vector.shape_cast %44 : vector<128xf32> to vector<1x128xf32>
    %46 = vector.broadcast %7 : vector<1x1xf32> to vector<1x128xf32>
    %47 = arith.addf %45, %46 : vector<1x128xf32>
    %c0_28 = arith.constant 0 : index
    %48 = arith.index_cast %9 : i32 to index
    %49 = vector.load %arg10[%c0_28, %48] : memref<1x128xf32, #tpu.memory_space<vmem>>, vector<1x128xf32>
    tpu.vector_store %arg10[%c0_28, %48], %47 {strides = array<i32>} : memref<1x128xf32, #tpu.memory_space<vmem>>, vector<1x128xf32>,
    %c1_i32 = arith.constant 1 : i32
    return
  }
  func.func @transform_0(%arg0: i32) -> (i32, i32) {
    %c0_i32 = arith.constant 0 : i32
    %c0_i32_0 = arith.constant 0 : i32
    return %c0_i32, %arg0 : i32, i32
  }
  func.func @transform_1(%arg0: i32) -> (i32, i32) {
    %c0_i32 = arith.constant 0 : i32
    %c0_i32_0 = arith.constant 0 : i32
    %c0_i32_1 = arith.constant 0 : i32
    return %c0_i32, %c0_i32_0 : i32, i32
  }
  func.func @transform_2(%arg0: i32) -> (i32, i32) {
    %c0_i32 = arith.constant 0 : i32
    %c0_i32_0 = arith.constant 0 : i32
    %c0_i32_1 = arith.constant 0 : i32
    return %c0_i32, %c0_i32_0 : i32, i32
  }
  func.func @transform_3(%arg0: i32) -> (i32, i32) {
    %c0_i32 = arith.constant 0 : i32
    %c0_i32_0 = arith.constant 0 : i32
    %c0_i32_1 = arith.constant 0 : i32
    return %c0_i32, %c0_i32_0 : i32, i32
  }
  func.func @transform_4(%arg0: i32) -> (i32, i32) {
    %c0_i32 = arith.constant 0 : i32
    %c0_i32_0 = arith.constant 0 : i32
    %c0_i32_1 = arith.constant 0 : i32
    return %c0_i32, %c0_i32_0 : i32, i32
  }
  func.func @transform_5(%arg0: i32) -> (i32, i32) {
    %c0_i32 = arith.constant 0 : i32
    %c0_i32_0 = arith.constant 0 : i32
    %c0_i32_1 = arith.constant 0 : i32
    return %c0_i32, %c0_i32_0 : i32, i32
  }
  func.func @transform_6(%arg0: i32) -> (i32, i32) {
    %c0_i32 = arith.constant 0 : i32
    %c0_i32_0 = arith.constant 0 : i32
    %c0_i32_1 = arith.constant 0 : i32
    return %c0_i32, %c0_i32_0 : i32, i32
  }
  func.func @transform_7(%arg0: i32) -> (i32, i32) {
    %c0_i32 = arith.constant 0 : i32
    %c0_i32_0 = arith.constant 0 : i32
    %c0_i32_1 = arith.constant 0 : i32
    return %c0_i32, %c0_i32_0 : i32, i32
  }
  func.func @transform_8(%arg0: i32) -> (i32, i32) {
    %c0_i32 = arith.constant 0 : i32
    %c0_i32_0 = arith.constant 0 : i32
    %c0_i32_1 = arith.constant 0 : i32
    return %c0_i32, %c0_i32_0 : i32, i32
  }
  func.func @transform_9(%arg0: i32) -> (i32, i32) {
    %c0_i32 = arith.constant 0 : i32
    %c0_i32_0 = arith.constant 0 : i32
    return %c0_i32, %arg0 : i32, i32
  }
}

</mosaic_0001>

<llo_original>
// kernel: phi_nn_forward_t.1
$region0: #{phi_nn_forward_t.1}
  #allocation0 [shape = 'u32[]', space=smem, size = 0x4, offset = 0x4, fixed_abs, tag = 'smem constant byte address 0x4 - core index']
  #allocation1 [shape = 'u32[144,128]{1,0:T(1,128)}', space=vmem, size = 0x12000, scoped, tag = 'internal scratch']
  #allocation2 [shape = 'f32[1,1]{1,0:T(1,128)S(1)}', space=vmem, size = 0x200, scoped, tag = 'scoped memory for phi_nn_forward_t.1']
  %s0 = inlined_call_operand.vmem [shape: f32[3,128], index: 0, kind: input, shape index: {}]
  %s1 = inlined_call_operand.vmem [shape: f32[32,3], index: 1, kind: input, shape index: {}]
  %s2 = inlined_call_operand.vmem [shape: f32[32,1], index: 2, kind: input, shape index: {}]
  %s3 = inlined_call_operand.vmem [shape: f32[32,32], index: 3, kind: input, shape index: {}]
  %s4 = inlined_call_operand.vmem [shape: f32[32,1], index: 4, kind: input, shape index: {}]
  %s5 = inlined_call_operand.vmem [shape: f32[32,32], index: 5, kind: input, shape index: {}]
  %s6 = inlined_call_operand.vmem [shape: f32[32,1], index: 6, kind: input, shape index: {}]
  %s7 = inlined_call_operand.vmem [shape: f32[32,1], index: 7, kind: input, shape index: {}]
  %s8 = inlined_call_operand.<no memory space> [shape: f32[1,1], index: 8, kind: input, shape index: {}]
  %s9 = inlined_call_operand.hbm [shape: f32[1,128], index: 9, kind: output, shape index: {}]
  %s10 = sld [smem:[#allocation0]]
  $region46: #{phi_nn_forward_t.1} parent=0
    _
  %s12 = ssub.s32 1, %s10
  %s13 = scalar_select 0, %s12, %s10
  %v14 = vstv %s8
  %15 = vst [vmem:[#allocation2] sm:$0x1] %v14
  $region1: #{phi_nn_forward_t.1} parent=0
    #allocation3 [shape = 'u8[512]{0}', space=vmem, size = 0x400, scoped, tag = 'output window, operand 0, single buffered']
    #allocation4 [shape = 's32[1]{0}', space=sflag, size = 0x4, scoped, tag = 'scoped memory for phi_nn_forward_t.1']
    %16 = vsyncpa [#allocation4], 0
    // Predicated region
    $region2: #{phi_nn_forward_t.1} parent=1 // pred_check
      _
    $region3: #{phi_nn_forward_t.1} parent=1 // pred_check_branch
      %18 = sbr.rel (0) target = $region5
    $region4: #{phi_nn_forward_t.1} parent=1 // pred_region
      _
    $region5: #{phi_nn_forward_t.1} parent=1 // pred_fallthru
      _
    // Predicated region
    $region6: #{phi_nn_forward_t.1} parent=1 // pred_check
      _
    $region7: #{phi_nn_forward_t.1} parent=1 // pred_check_branch
      %20 = sbr.rel (0) target = $region9
    $region8: #{phi_nn_forward_t.1} parent=1 // pred_region
      _
    $region9: #{phi_nn_forward_t.1} parent=1 // pred_fallthru
      _
    // Predicated region
    $region10: #{phi_nn_forward_t.1} parent=1 // pred_check
      _
    $region11: #{phi_nn_forward_t.1} parent=1 // pred_check_branch
      %22 = sbr.rel (0) target = $region13
    $region12: #{phi_nn_forward_t.1} parent=1 // pred_region
      _
    $region13: #{phi_nn_forward_t.1} parent=1 // pred_fallthru
      _
    // Predicated region
    $region14: #{phi_nn_forward_t.1} parent=1 // pred_check
      _
    $region15: #{phi_nn_forward_t.1} parent=1 // pred_check_branch
      %24 = sbr.rel (0) target = $region17
    $region16: #{phi_nn_forward_t.1} parent=1 // pred_region
      _
    $region17: #{phi_nn_forward_t.1} parent=1 // pred_fallthru
      _
    // Predicated region
    $region18: #{phi_nn_forward_t.1} parent=1 // pred_check
      _
    $region19: #{phi_nn_forward_t.1} parent=1 // pred_check_branch
      %26 = sbr.rel (0) target = $region21
    $region20: #{phi_nn_forward_t.1} parent=1 // pred_region
      _
    $region21: #{phi_nn_forward_t.1} parent=1 // pred_fallthru
      _
    // Predicated region
    $region22: #{phi_nn_forward_t.1} parent=1 // pred_check
      _
    $region23: #{phi_nn_forward_t.1} parent=1 // pred_check_branch
      %28 = sbr.rel (0) target = $region25
    $region24: #{phi_nn_forward_t.1} parent=1 // pred_region
      _
    $region25: #{phi_nn_forward_t.1} parent=1 // pred_fallthru
      _
    // Predicated region
    $region26: #{phi_nn_forward_t.1} parent=1 // pred_check
      _
    $region27: #{phi_nn_forward_t.1} parent=1 // pred_check_branch
      %30 = sbr.rel (0) target = $region29
    $region28: #{phi_nn_forward_t.1} parent=1 // pred_region
      _
    $region29: #{phi_nn_forward_t.1} parent=1 // pred_fallthru
      _
    // Predicated region
    $region30: #{phi_nn_forward_t.1} parent=1 // pred_check
      _
    $region31: #{phi_nn_forward_t.1} parent=1 // pred_check_branch
      %32 = sbr.rel (0) target = $region33
    $region32: #{phi_nn_forward_t.1} parent=1 // pred_region
      _
    $region33: #{phi_nn_forward_t.1} parent=1 // pred_fallthru
      _
    // Predicated region
    $region34: #{phi_nn_forward_t.1} parent=1 // pred_check
      _
    $region35: #{phi_nn_forward_t.1} parent=1 // pred_check_branch
      %34 = sbr.rel (0) target = $region37
    $region36: #{phi_nn_forward_t.1} parent=1 // pred_region
      _
    $region37: #{phi_nn_forward_t.1} parent=1 // pred_fallthru
      _
    %v35 = vld [vmem:[%s1] sm:$0xff]
    %v36 = vld [vmem:[%s1 + $0x8] sm:$0xff]
    %v37 = vld [vmem:[%s1 + $0x10] sm:$0xff]
    %v38 = vld [vmem:[%s1 + $0x18] sm:$0xff]
    %v39 = vld [vmem:[%s3] sm:$0xff]
    %v40 = vld [vmem:[%s3 + $0x8] sm:$0xff]
    %v41 = vld [vmem:[%s3 + $0x10] sm:$0xff]
    %v42 = vld [vmem:[%s3 + $0x18] sm:$0xff]
    %v43 = vld [vmem:[%s5] sm:$0xff]
    %v44 = vld [vmem:[%s5 + $0x8] sm:$0xff]
    %v45 = vld [vmem:[%s5 + $0x10] sm:$0xff]
    %v46 = vld [vmem:[%s5 + $0x18] sm:$0xff]
    %v47 = vld [vmem:[%s2] sm:$0xff]
    %v48 = vld [vmem:[%s2 + $0x8] sm:$0xff]
    %v49 = vld [vmem:[%s2 + $0x10] sm:$0xff]
    %v50 = vld [vmem:[%s2 + $0x18] sm:$0xff]
    %v51 = vld [vmem:[%s4] sm:$0xff]
    %v52 = vld [vmem:[%s4 + $0x8] sm:$0xff]
    %v53 = vld [vmem:[%s4 + $0x10] sm:$0xff]
    %v54 = vld [vmem:[%s4 + $0x18] sm:$0xff]
    %v55 = vld [vmem:[%s6] sm:$0xff]
    %v56 = vld [vmem:[%s6 + $0x8] sm:$0xff]
    %v57 = vld [vmem:[%s6 + $0x10] sm:$0xff]
    %v58 = vld [vmem:[%s6 + $0x18] sm:$0xff]
    %v59 = vld [vmem:[%s7] sm:$0xff]
    %v60 = vld [vmem:[%s7 + $0x8] sm:$0xff]
    %v61 = vld [vmem:[%s7 + $0x10] sm:$0xff]
    %v62 = vld [vmem:[%s7 + $0x18] sm:$0xff]
    %v63 = vld [vmem:[#allocation2] sm:$0x1]
    %v64 = vld [vmem:[%s0] sm:$0x7]
    %66 = vset.pattern.permute.xlu0 0
    %67 = vperm.xlu0 %66, %v47
    %v68 = vpop.permute.xlu0 %67
    %71 = vset.pattern.permute.xlu0 0
    %72 = vperm.xlu0 %71, %v48
    %v73 = vpop.permute.xlu0 %72
    %76 = vset.pattern.permute.xlu0 0
    %77 = vperm.xlu0 %76, %v49
    %v78 = vpop.permute.xlu0 %77
    %81 = vset.pattern.permute.xlu0 0
    %82 = vperm.xlu0 %81, %v50
    %v83 = vpop.permute.xlu0 %82
    %vm85 = vcmask 23552
    %v87 = vsel %vm85, %v35, 0
    %v90 = vsel %vm85, %v36, 0
    %v93 = vsel %vm85, %v37, 0
    %v96 = vsel %vm85, %v38, 0
    %vm98 = vcmask 1042432
    %v100 = vsel %vm98, %v64, 0
    %102 = vmatprep.subr.mxu0 0.0
    %103 = vmatpush1.msra.mxu0 0.0
    %104 = vmatprep.subr.mxu0 0.0
    %105 = vmatpush1.msra.mxu0 0.0
    %106 = vmatprep.subr.mxu0 0.0
    %107 = vmatpush1.msra.mxu0 0.0
    %108 = vmatprep.subr.mxu0 0.0
    %109 = vmatpush1.msra.mxu0 0.0
    %110 = vmatprep.subr.mxu0 0.0
    %111 = vmatpush1.msra.mxu0 0.0
    %112 = vmatprep.subr.mxu0 0.0
    %113 = vmatpush1.msra.mxu0 0.0
    %114 = vmatprep.subr.mxu0 0.0
    %115 = vmatpush1.msra.mxu0 0.0
    %116 = vmatprep.subr.mxu0 0.0
    %117 = vmatpush1.msra.mxu0 0.0
    %118 = vmatprep.subr.mxu0 0.0
    %119 = vmatpush1.msra.mxu0 0.0
    %120 = vmatprep.subr.mxu0 0.0
    %121 = vmatpush1.msra.mxu0 0.0
    %122 = vmatprep.subr.mxu0 0.0
    %123 = vmatpush1.msra.mxu0 0.0
    %124 = vmatprep.subr.mxu0 0.0
    %125 = vmatpush1.msra.mxu0 0.0
    %126 = vmatprep.subr.mxu0 0.0
    %127 = vmatpush1.msra.mxu0 0.0
    %128 = vmatprep.subr.mxu0 0.0
    %129 = vmatpush1.msra.mxu0 0.0
    %130 = vmatprep.subr.mxu0 0.0
    %131 = vmatpush1.msra.mxu0 0.0
    %132 = vmatprep.subr.mxu0 0.0
    %133 = vmatpush1.msra.mxu0 %v100
    %134 = vmatprep.subr.mxu0 0.0
    %135 = vmatpush2.msra.mxu0 0.0
    %136 = vmatprep.subr.mxu0 0.0
    %137 = vmatpush2.msra.mxu0 0.0
    %138 = vmatprep.subr.mxu0 0.0
    %139 = vmatpush2.msra.mxu0 0.0
    %140 = vmatprep.subr.mxu0 0.0
    %141 = vmatpush2.msra.mxu0 0.0
    %142 = vmatprep.subr.mxu0 0.0
    %143 = vmatpush2.msra.mxu0 0.0
    %144 = vmatprep.subr.mxu0 0.0
    %145 = vmatpush2.msra.mxu0 0.0
    %146 = vmatprep.subr.mxu0 0.0
    %147 = vmatpush2.msra.mxu0 0.0
    %148 = vmatprep.subr.mxu0 0.0
    %149 = vmatpush2.msra.mxu0 0.0
    %150 = vmatprep.subr.mxu0 0.0
    %151 = vmatpush2.msra.mxu0 0.0
    %152 = vmatprep.subr.mxu0 0.0
    %153 = vmatpush2.msra.mxu0 0.0
    %154 = vmatprep.subr.mxu0 0.0
    %155 = vmatpush2.msra.mxu0 0.0
    %156 = vmatprep.subr.mxu0 0.0
    %157 = vmatpush2.msra.mxu0 0.0
    %158 = vmatprep.subr.mxu0 0.0
    %159 = vmatpush2.msra.mxu0 0.0
    %160 = vmatprep.subr.mxu0 0.0
    %161 = vmatpush2.msra.mxu0 0.0
    %162 = vmatprep.subr.mxu0 0.0
    %163 = vmatpush2.msra.mxu0 0.0
    %164 = vmatprep.subr.mxu0 0.0
    %165 = vmatpush2.msra.mxu0 0.0
    %166 = vmatprep.mubr.f32.mxu0 0.0
    %167 = vmatmul.mubr.f32.gmra.mxu0 %v87
    %v168 = vpop.f32.mrf.mxu0
    %v169 = vadd.f32 %v68, %v168
    %v170 = vpop.f32.mrf.mxu0
    %171 = vmatprep.mubr.f32.mxu0 0.0
    %172 = vmatmul.mubr.f32.gmra.mxu0 %v90
    %v173 = vpop.f32.mrf.mxu0
    %v174 = vadd.f32 %v73, %v173
    %v175 = vpop.f32.mrf.mxu0
    %176 = vmatprep.mubr.f32.mxu0 0.0
    %177 = vmatmul.mubr.f32.gmra.mxu0 %v93
    %v178 = vpop.f32.mrf.mxu0
    %v179 = vadd.f32 %v78, %v178
    %v180 = vpop.f32.mrf.mxu0
    %181 = vmatprep.mubr.f32.mxu0 0.0
    %182 = vmatmul.mubr.f32.gmra.mxu0 %v96
    %v183 = vpop.f32.mrf.mxu0
    %v184 = vadd.f32 %v83, %v183
    %v185 = vpop.f32.mrf.mxu0
    %186 = vdwg.mxu0
    %v187 = vmul.f32 %v169, 0.5
    %v188 = vmul.f32 %v174, 0.5
    %v189 = vmul.f32 %v179, 0.5
    %v190 = vmul.f32 %v184, 0.5
    %v191 = vtanh.pop %v187
    %v192 = vtanh.pop %v188
    %v193 = vtanh.pop %v189
    %v194 = vtanh.pop %v190
    %v195 = vmul.f32 %v191, 0.5
    %v196 = vmul.f32 %v192, 0.5
    %v197 = vmul.f32 %v193, 0.5
    %v198 = vmul.f32 %v194, 0.5
    %v199 = vadd.f32 %v195, 0.5
    %v200 = vadd.f32 %v196, 0.5
    %v201 = vadd.f32 %v197, 0.5
    %v202 = vadd.f32 %v198, 0.5
    %204 = vset.pattern.permute.xlu0 0
    %205 = vperm.xlu0 %204, %v51
    %v206 = vpop.permute.xlu0 %205
    %209 = vset.pattern.permute.xlu0 0
    %210 = vperm.xlu0 %209, %v52
    %v211 = vpop.permute.xlu0 %210
    %214 = vset.pattern.permute.xlu0 0
    %215 = vperm.xlu0 %214, %v53
    %v216 = vpop.permute.xlu0 %215
    %219 = vset.pattern.permute.xlu0 0
    %220 = vperm.xlu0 %219, %v54
    %v221 = vpop.permute.xlu0 %220
    %vm223 = vcmask 261120
    %v225 = vsel %vm223, %v39, 0
    %v228 = vsel %vm223, %v40, 0
    %v231 = vsel %vm223, %v41, 0
    %v234 = vsel %vm223, %v42, 0
    %236 = vmatprep.subr.mxu0 0.0
    %237 = vmatpush1.msra.mxu0 0.0
    %238 = vmatprep.subr.mxu0 0.0
    %239 = vmatpush1.msra.mxu0 0.0
    %240 = vmatprep.subr.mxu0 0.0
    %241 = vmatpush1.msra.mxu0 0.0
    %242 = vmatprep.subr.mxu0 0.0
    %243 = vmatpush1.msra.mxu0 0.0
    %244 = vmatprep.subr.mxu0 0.0
    %245 = vmatpush1.msra.mxu0 0.0
    %246 = vmatprep.subr.mxu0 0.0
    %247 = vmatpush1.msra.mxu0 0.0
    %248 = vmatprep.subr.mxu0 0.0
    %249 = vmatpush1.msra.mxu0 0.0
    %250 = vmatprep.subr.mxu0 0.0
    %251 = vmatpush1.msra.mxu0 0.0
    %252 = vmatprep.subr.mxu0 0.0
    %253 = vmatpush1.msra.mxu0 0.0
    %254 = vmatprep.subr.mxu0 0.0
    %255 = vmatpush1.msra.mxu0 0.0
    %256 = vmatprep.subr.mxu0 0.0
    %257 = vmatpush1.msra.mxu0 0.0
    %258 = vmatprep.subr.mxu0 0.0
    %259 = vmatpush1.msra.mxu0 0.0
    %260 = vmatprep.subr.mxu0 0.0
    %261 = vmatpush1.msra.mxu0 %v202
    %262 = vmatprep.subr.mxu0 0.0
    %263 = vmatpush1.msra.mxu0 %v201
    %264 = vmatprep.subr.mxu0 0.0
    %265 = vmatpush1.msra.mxu0 %v200
    %266 = vmatprep.subr.mxu0 0.0
    %267 = vmatpush1.msra.mxu0 %v199
    %268 = vmatprep.subr.mxu0 0.0
    %269 = vmatpush2.msra.mxu0 0.0
    %270 = vmatprep.subr.mxu0 0.0
    %271 = vmatpush2.msra.mxu0 0.0
    %272 = vmatprep.subr.mxu0 0.0
    %273 = vmatpush2.msra.mxu0 0.0
    %274 = vmatprep.subr.mxu0 0.0
    %275 = vmatpush2.msra.mxu0 0.0
    %276 = vmatprep.subr.mxu0 0.0
    %277 = vmatpush2.msra.mxu0 0.0
    %278 = vmatprep.subr.mxu0 0.0
    %279 = vmatpush2.msra.mxu0 0.0
    %280 = vmatprep.subr.mxu0 0.0
    %281 = vmatpush2.msra.mxu0 0.0
    %282 = vmatprep.subr.mxu0 0.0
    %283 = vmatpush2.msra.mxu0 0.0
    %284 = vmatprep.subr.mxu0 0.0
    %285 = vmatpush2.msra.mxu0 0.0
    %286 = vmatprep.subr.mxu0 0.0
    %287 = vmatpush2.msra.mxu0 0.0
    %288 = vmatprep.subr.mxu0 0.0
    %289 = vmatpush2.msra.mxu0 0.0
    %290 = vmatprep.subr.mxu0 0.0
    %291 = vmatpush2.msra.mxu0 0.0
    %292 = vmatprep.subr.mxu0 0.0
    %293 = vmatpush2.msra.mxu0 0.0
    %294 = vmatprep.subr.mxu0 0.0
    %295 = vmatpush2.msra.mxu0 0.0
    %296 = vmatprep.subr.mxu0 0.0
    %297 = vmatpush2.msra.mxu0 0.0
    %298 = vmatprep.subr.mxu0 0.0
    %299 = vmatpush2.msra.mxu0 0.0
    %300 = vmatprep.mubr.f32.mxu0 0.0
    %301 = vmatmul.mubr.f32.gmra.mxu0 %v225
    %v302 = vpop.f32.mrf.mxu0
    %v303 = vadd.f32 %v206, %v302
    %v304 = vpop.f32.mrf.mxu0
    %305 = vmatprep.mubr.f32.mxu0 0.0
    %306 = vmatmul.mubr.f32.gmra.mxu0 %v228
    %v307 = vpop.f32.mrf.mxu0
    %v308 = vadd.f32 %v211, %v307
    %v309 = vpop.f32.mrf.mxu0
    %310 = vmatprep.mubr.f32.mxu0 0.0
    %311 = vmatmul.mubr.f32.gmra.mxu0 %v231
    %v312 = vpop.f32.mrf.mxu0
    %v313 = vadd.f32 %v216, %v312
    %v314 = vpop.f32.mrf.mxu0
    %315 = vmatprep.mubr.f32.mxu0 0.0
    %316 = vmatmul.mubr.f32.gmra.mxu0 %v234
    %v317 = vpop.f32.mrf.mxu0
    %v318 = vadd.f32 %v221, %v317
    %v319 = vpop.f32.mrf.mxu0
    %320 = vdwg.mxu0
    %v321 = vmul.f32 %v303, 0.5
    %v322 = vmul.f32 %v308, 0.5
    %v323 = vmul.f32 %v313, 0.5
    %v324 = vmul.f32 %v318, 0.5
    %v325 = vtanh.pop %v321
    %v326 = vtanh.pop %v322
    %v327 = vtanh.pop %v323
    %v328 = vtanh.pop %v324
    %v329 = vmul.f32 %v325, 0.5
    %v330 = vmul.f32 %v326, 0.5
    %v331 = vmul.f32 %v327, 0.5
    %v332 = vmul.f32 %v328, 0.5
    %v333 = vadd.f32 %v329, 0.5
    %v334 = vadd.f32 %v330, 0.5
    %v335 = vadd.f32 %v331, 0.5
    %v336 = vadd.f32 %v332, 0.5
    %338 = vset.pattern.permute.xlu0 0
    %339 = vperm.xlu0 %338, %v55
    %v340 = vpop.permute.xlu0 %339
    %343 = vset.pattern.permute.xlu0 0
    %344 = vperm.xlu0 %343, %v56
    %v345 = vpop.permute.xlu0 %344
    %348 = vset.pattern.permute.xlu0 0
    %349 = vperm.xlu0 %348, %v57
    %v350 = vpop.permute.xlu0 %349
    %353 = vset.pattern.permute.xlu0 0
    %354 = vperm.xlu0 %353, %v58
    %v355 = vpop.permute.xlu0 %354
    %v358 = vsel %vm223, %v43, 0
    %v361 = vsel %vm223, %v44, 0
    %v364 = vsel %vm223, %v45, 0
    %v367 = vsel %vm223, %v46, 0
    %369 = vmatprep.subr.mxu0 0.0
    %370 = vmatpush1.msra.mxu0 0.0
    %371 = vmatprep.subr.mxu0 0.0
    %372 = vmatpush1.msra.mxu0 0.0
    %373 = vmatprep.subr.mxu0 0.0
    %374 = vmatpush1.msra.mxu0 0.0
    %375 = vmatprep.subr.mxu0 0.0
    %376 = vmatpush1.msra.mxu0 0.0
    %377 = vmatprep.subr.mxu0 0.0
    %378 = vmatpush1.msra.mxu0 0.0
    %379 = vmatprep.subr.mxu0 0.0
    %380 = vmatpush1.msra.mxu0 0.0
    %381 = vmatprep.subr.mxu0 0.0
    %382 = vmatpush1.msra.mxu0 0.0
    %383 = vmatprep.subr.mxu0 0.0
    %384 = vmatpush1.msra.mxu0 0.0
    %385 = vmatprep.subr.mxu0 0.0
    %386 = vmatpush1.msra.mxu0 0.0
    %387 = vmatprep.subr.mxu0 0.0
    %388 = vmatpush1.msra.mxu0 0.0
    %389 = vmatprep.subr.mxu0 0.0
    %390 = vmatpush1.msra.mxu0 0.0
    %391 = vmatprep.subr.mxu0 0.0
    %392 = vmatpush1.msra.mxu0 0.0
    %393 = vmatprep.subr.mxu0 0.0
    %394 = vmatpush1.msra.mxu0 %v336
    %395 = vmatprep.subr.mxu0 0.0
    %396 = vmatpush1.msra.mxu0 %v335
    %397 = vmatprep.subr.mxu0 0.0
    %398 = vmatpush1.msra.mxu0 %v334
    %399 = vmatprep.subr.mxu0 0.0
    %400 = vmatpush1.msra.mxu0 %v333
    %401 = vmatprep.subr.mxu0 0.0
    %402 = vmatpush2.msra.mxu0 0.0
    %403 = vmatprep.subr.mxu0 0.0
    %404 = vmatpush2.msra.mxu0 0.0
    %405 = vmatprep.subr.mxu0 0.0
    %406 = vmatpush2.msra.mxu0 0.0
    %407 = vmatprep.subr.mxu0 0.0
    %408 = vmatpush2.msra.mxu0 0.0
    %409 = vmatprep.subr.mxu0 0.0
    %410 = vmatpush2.msra.mxu0 0.0
    %411 = vmatprep.subr.mxu0 0.0
    %412 = vmatpush2.msra.mxu0 0.0
    %413 = vmatprep.subr.mxu0 0.0
    %414 = vmatpush2.msra.mxu0 0.0
    %415 = vmatprep.subr.mxu0 0.0
    %416 = vmatpush2.msra.mxu0 0.0
    %417 = vmatprep.subr.mxu0 0.0
    %418 = vmatpush2.msra.mxu0 0.0
    %419 = vmatprep.subr.mxu0 0.0
    %420 = vmatpush2.msra.mxu0 0.0
    %421 = vmatprep.subr.mxu0 0.0
    %422 = vmatpush2.msra.mxu0 0.0
    %423 = vmatprep.subr.mxu0 0.0
    %424 = vmatpush2.msra.mxu0 0.0
    %425 = vmatprep.subr.mxu0 0.0
    %426 = vmatpush2.msra.mxu0 0.0
    %427 = vmatprep.subr.mxu0 0.0
    %428 = vmatpush2.msra.mxu0 0.0
    %429 = vmatprep.subr.mxu0 0.0
    %430 = vmatpush2.msra.mxu0 0.0
    %431 = vmatprep.subr.mxu0 0.0
    %432 = vmatpush2.msra.mxu0 0.0
    %433 = vmatprep.mubr.f32.mxu0 0.0
    %434 = vmatmul.mubr.f32.gmra.mxu0 %v358
    %v435 = vpop.f32.mrf.mxu0
    %v436 = vadd.f32 %v340, %v435
    %v437 = vpop.f32.mrf.mxu0
    %438 = vmatprep.mubr.f32.mxu0 0.0
    %439 = vmatmul.mubr.f32.gmra.mxu0 %v361
    %v440 = vpop.f32.mrf.mxu0
    %v441 = vadd.f32 %v345, %v440
    %v442 = vpop.f32.mrf.mxu0
    %443 = vmatprep.mubr.f32.mxu0 0.0
    %444 = vmatmul.mubr.f32.gmra.mxu0 %v364
    %v445 = vpop.f32.mrf.mxu0
    %v446 = vadd.f32 %v350, %v445
    %v447 = vpop.f32.mrf.mxu0
    %448 = vmatprep.mubr.f32.mxu0 0.0
    %449 = vmatmul.mubr.f32.gmra.mxu0 %v367
    %v450 = vpop.f32.mrf.mxu0
    %v451 = vadd.f32 %v355, %v450
    %v452 = vpop.f32.mrf.mxu0
    %453 = vdwg.mxu0
    %v454 = vmul.f32 %v436, 0.5
    %v455 = vmul.f32 %v441, 0.5
    %v456 = vmul.f32 %v446, 0.5
    %v457 = vmul.f32 %v451, 0.5
    %v458 = vtanh.pop %v454
    %v459 = vtanh.pop %v455
    %v460 = vtanh.pop %v456
    %v461 = vtanh.pop %v457
    %v462 = vmul.f32 %v458, 0.5
    %v463 = vmul.f32 %v459, 0.5
    %v464 = vmul.f32 %v460, 0.5
    %v465 = vmul.f32 %v461, 0.5
    %v466 = vadd.f32 %v462, 0.5
    %v467 = vadd.f32 %v463, 0.5
    %v468 = vadd.f32 %v464, 0.5
    %v469 = vadd.f32 %v465, 0.5
    %471 = vset.pattern.permute.xlu0 0
    %472 = vperm.xlu0 %471, %v59
    %v473 = vpop.permute.xlu0 %472
    %476 = vset.pattern.permute.xlu0 0
    %477 = vperm.xlu0 %476, %v60
    %v478 = vpop.permute.xlu0 %477
    %481 = vset.pattern.permute.xlu0 0
    %482 = vperm.xlu0 %481, %v61
    %v483 = vpop.permute.xlu0 %482
    %486 = vset.pattern.permute.xlu0 0
    %487 = vperm.xlu0 %486, %v62
    %v488 = vpop.permute.xlu0 %487
    %v490 = vmul.f32 %v466, %v473
    %v491 = vmul.f32 %v467, %v478
    %v492 = vmul.f32 %v468, %v483
    %v493 = vmul.f32 %v469, %v488
    %v494 = vadd.f32 %v490, %v491
    %v495 = vadd.f32 %v494, %v492
    %v496 = vadd.f32 %v495, %v493
    %v497 = vrot.slane %v496, 4
    %v498 = vadd.f32 %v496, %v497
    %v499 = vrot.slane %v498, 2
    %v500 = vadd.f32 %v498, %v499
    %v501 = vrot.slane %v500, 1
    %v502 = vadd.f32 %v500, %v501
    %504 = vset.pattern.permute.xlu0 0
    %505 = vperm.xlu0 %504, %v63
    %v506 = vpop.permute.xlu0 %505
    %v508 = vlaneseq
    %v509 = vshrl.u32 %v508, 7
    %v510 = vsub.s32 0, %v509
    %v511 = vrot.slane %v506, %v510
    %v512 = vadd.f32 %v502, %v511
    %513 = vst [vmem:[#allocation3] sm:$0x1] %v512
    // Predicated region
    $region38: #{phi_nn_forward_t.1} parent=1 // pred_check
      _
    $region39: #{phi_nn_forward_t.1} parent=1 // pred_check_branch
      %515 = sbr.rel (0) target = $region41
    $region40: #{phi_nn_forward_t.1} parent=1 // pred_region
      %s517 = ssub.s32 16, 16
      %518 = vsyncadd [#allocation4], %s517
      %s520 = sshll.u32 [#allocation3], 4
      %s521 = int_to_ptr.vmem [resolvable:$true] %s520
      %523 = dma.vmem_to_hbm [thread:$0]  %s521, 16, %s9, [#allocation4]
    $region41: #{phi_nn_forward_t.1} parent=1 // pred_fallthru
      _
    // Predicated region
    $region42: #{phi_nn_forward_t.1} parent=1 // pred_check
      _
    $region43: #{phi_nn_forward_t.1} parent=1 // pred_check_branch
      %525 = sbr.rel (0) target = $region45
    $region44: #{phi_nn_forward_t.1} parent=1 // pred_region
      %526 = dma.done [#allocation4], 16
    $region45: #{phi_nn_forward_t.1} parent=1 // pred_fallthru
      _
    %527 = vsyncpa [#allocation4], 1

</llo_original>
